<compile_context>
chip_gen: v7x
topology: tpu7x:2x2x1
jax: 0.10.0
libtpu: 0.0.40
codegen_flags: <defaults>
</compile_context>

<pallas_src>
import functools
import math

import jax
import jax.numpy as jnp
from jax import lax
from jax.experimental import pallas as pl
from jax.experimental.pallas import tpu as pltpu


def _layer_norm(v, gamma, beta, eps=1e-5):
    mu = jnp.mean(v, axis=-1, keepdims=True)
    var = jnp.mean((v - mu) ** 2, axis=-1, keepdims=True)
    return (v - mu) * lax.rsqrt(var + eps) * gamma + beta


# ---------------------------------------------------------------------------
# Pass 1: LayerNorm1 + fused QKV projection (computed once per sequence tile).
# ---------------------------------------------------------------------------
def qkv_proj_kernel(D, scale,
                    x_ref, g1_ref, b1_ref, wqkv_ref, bqkv_ref,
                    q_ref, kv_ref):
    mm_dtype = wqkv_ref.dtype
    h = _layer_norm(x_ref[0], g1_ref[...], b1_ref[...])                  # [TS, D] f32
    qkv = jnp.dot(h.astype(mm_dtype), wqkv_ref[...],
                  preferred_element_type=jnp.float32) + bqkv_ref[...]    # [TS, 3D] f32
    # 1/sqrt(dh) folded into q (bias included) == scaling the scores.
    q_ref[0] = (qkv[:, :D] * scale).astype(q_ref.dtype)
    kv_ref[0] = qkv[:, D:].astype(kv_ref.dtype)


# ---------------------------------------------------------------------------
# Pass 2: flash-style attention (online softmax over KV tiles) + output
# projection + FFN, both residual sublayers fused.
# ---------------------------------------------------------------------------
def attn_ffn_kernel(n_head, D,
                    x_ref, mask_ref, q_ref, kv_ref,
                    wo_ref, bo_ref, g2_ref, b2_ref,
                    w1_ref, bf1_ref, w2_ref, bf2_ref,
                    o_ref,
                    m_sc, l_sc, acc_sc):
    dh = D // n_head
    mm_dtype = kv_ref.dtype
    tq = q_ref.shape[1]
    tkv = kv_ref.shape[1]
    ki = pl.program_id(2)

    @pl.when(ki == 0)
    def _():
        m_sc[...] = jnp.full(m_sc.shape, -1e30, m_sc.dtype)
        l_sc[...] = jnp.zeros(l_sc.shape, l_sc.dtype)
        acc_sc[...] = jnp.zeros(acc_sc.shape, acc_sc.dtype)

    qb = q_ref[0]                               # [TQ, D]   bf16, pre-scaled
    kvb = kv_ref[0]                             # [TKV, 2D] bf16: k=[:, :D], v=[:, D:]

    # Additive mask bias, broadcast once (hoisted out of the head loop).
    bias = pl.broadcast_to(
        jnp.where(mask_ref[0] == 0, jnp.float32(-1e9), jnp.float32(0.0)),
        (tq, tkv))                              # [TQ, TKV] f32

    for h in range(n_head):                     # static unroll over heads
        lo = h * dh
        qs = qb[:, lo:lo + dh]                  # [TQ, dh]
        ks = kvb[:, lo:lo + dh]                 # [TKV, dh]
        vs = kvb[:, D + lo:D + lo + dh]         # [TKV, dh]
        # q @ k^T without materializing a transpose: contract dh of both operands.
        s = lax.dot_general(qs, ks, (((1,), (1,)), ((), ())),
                            preferred_element_type=jnp.float32) + bias   # [TQ, TKV]
        m_prev = m_sc[h]                                                 # [TQ, 1]
        m_new = jnp.maximum(m_prev, jnp.max(s, axis=-1, keepdims=True))
        alpha = jnp.exp(m_prev - m_new)
        p = jnp.exp(s - m_new)
        l_sc[h] = alpha * l_sc[h] + jnp.sum(p, axis=-1, keepdims=True)
        pv = jnp.dot(p.astype(mm_dtype), vs,
                     preferred_element_type=jnp.float32)                 # [TQ, dh]
        acc_sc[:, lo:lo + dh] = alpha * acc_sc[:, lo:lo + dh] + pv
        m_sc[h] = m_new

    @pl.when(ki == pl.num_programs(2) - 1)
    def _():
        # Per-head softmax normalization (exact divide), written back in place.
        for h in range(n_head):
            lo = h * dh
            acc_sc[:, lo:lo + dh] = acc_sc[:, lo:lo + dh] / l_sc[h]
        # ONE K=D output projection (per-head wo fold removed per review).
        attn = jnp.dot(acc_sc[...].astype(mm_dtype), wo_ref[...],
                       preferred_element_type=jnp.float32) + bo_ref[...]
        # TODO(synk): dropout is stochastic at train time; eval-mode identity here.
        x1 = x_ref[0] + attn                                   # residual sublayer 0
        h2 = _layer_norm(x1, g2_ref[...], b2_ref[...])
        ff = jnp.maximum(
            jnp.dot(h2.astype(mm_dtype), w1_ref[...],
                    preferred_element_type=jnp.float32) + bf1_ref[...], 0.0)
        ff = jnp.dot(ff.astype(mm_dtype), w2_ref[...],
                     preferred_element_type=jnp.float32) + bf2_ref[...]
        o_ref[0] = (x1 + ff).astype(o_ref.dtype)               # residual sublayer 1


# ---------------------------------------------------------------------------
# Wrapper: per-generation tiles + VMEM budgets, two pallas_calls.
# ---------------------------------------------------------------------------
def _vmem_capacity_bytes(default=64 << 20):
    try:
        info = pltpu.get_tpu_info()
        return int(getattr(info, "vmem_capacity_bytes", default))
    except Exception:
        return default


def _clamp_vmem(need, cap):
    # Leave 12 MiB headroom below physical VMEM (compiler scratch, semaphores).
    return int(min(max(int(need), 16 << 20), cap - (12 << 20)))


def simple_encoder_layer(x, mask, params, n_head, *, q_tile=None, kv_tile=None,
                         matmul_dtype=jnp.bfloat16):
    B, S, D = x.shape
    F = params["w1"].shape[-1]
    assert D % n_head == 0
    scale = 1.0 / math.sqrt(D // n_head)

    # ---- per-generation tiling / VMEM budget (v7x: 64 MiB, v5e/v6e: 128 MiB) ----
    cap = _vmem_capacity_bytes()
    big_vmem = cap >= (96 << 20)
    if q_tile is None:
        q_tile = 256 if big_vmem else 128
    if kv_tile is None:
        kv_tile = 512 if big_vmem else 256
    TQ = S if S <= q_tile else q_tile
    TKV = S if S <= kv_tile else kv_tile
    assert S % TQ == 0 and S % TKV == 0, "sequence length must divide the tiles"
    n_q, n_kv = S // TQ, S // TKV

    mm = lambda w: w.astype(matmul_dtype)
    f32 = lambda w: w.astype(jnp.float32)
    isz = jnp.dtype(matmul_dtype).itemsize

    def full_spec(a):
        nd = a.ndim
        return pl.BlockSpec(a.shape, lambda *_, nd=nd: (0,) * nd)

    # ---------------- pass 1: LN1 + fused QKV projection ----------------------
    wqkv = jnp.concatenate([params["wq"], params["wk"], params["wv"]], axis=1)  # [D,3D]
    bqkv = jnp.concatenate([params["bq"], params["bk"], params["bv"]], axis=1)  # [1,3D]
    proj_weights = [f32(params["ln1_g"]), f32(params["ln1_b"]), mm(wqkv), f32(bqkv)]
    wbytes1 = sum(int(w.size) * w.dtype.itemsize for w in proj_weights)

    TS = TQ
    n_s = S // TS
    blk1 = TS * D * x.dtype.itemsize + TS * 3 * D * isz
    live1 = (TS * D + TS * 3 * D) * 4
    vmem1 = _clamp_vmem(2 * (blk1 + wbytes1) + live1 + (4 << 20), cap)
    cost1 = pl.CostEstimate(
        flops=int(6 * B * S * D * D),
        transcendentals=int(B * S),
        bytes_accessed=int(x.size * x.dtype.itemsize + B * S * 3 * D * isz + wbytes1))

    q_proj, kv_proj = pl.pallas_call(
        functools.partial(qkv_proj_kernel, D, scale),
        out_shape=(jax.ShapeDtypeStruct((B, S, D), matmul_dtype),
                   jax.ShapeDtypeStruct((B, S, 2 * D), matmul_dtype)),
        grid_spec=pltpu.PrefetchScalarGridSpec(
            num_scalar_prefetch=0,
            grid=(B, n_s),
            in_specs=[pl.BlockSpec((1, TS, D), lambda b, s: (b, s, 0))]
                     + [full_spec(w) for w in proj_weights],
            out_specs=[pl.BlockSpec((1, TS, D), lambda b, s: (b, s, 0)),
                       pl.BlockSpec((1, TS, 2 * D), lambda b, s: (b, s, 0))],
        ),
        compiler_params=pltpu.CompilerParams(
            dimension_semantics=("parallel", "parallel"),
            vmem_limit_bytes=vmem1),
        cost_estimate=cost1,
    )(x, *proj_weights)

    # --------- pass 2: flash attention + output projection + FFN --------------
    attn_weights = [mm(params["wo"]), f32(params["bo"]),
                    f32(params["ln2_g"]), f32(params["ln2_b"]),
                    mm(params["w1"]), f32(params["b1"]),
                    mm(params["w2"]), f32(params["b2"])]
    wbytes2 = sum(int(w.size) * w.dtype.itemsize for w in attn_weights)

    blk2 = (TQ * D * x.dtype.itemsize       # x residual tile (f32)
            + TKV * mask.dtype.itemsize     # mask tile
            + TQ * D * isz                  # q tile (bf16)
            + TKV * 2 * D * isz             # kv tile (bf16)
            + TQ * D * x.dtype.itemsize)    # out tile
    scratch2 = (2 * n_head * TQ * 128 + TQ * D) * 4          # m/l (lane-padded) + acc
    live2 = (3 * TQ * TKV + TQ * F + 4 * TQ * D) * 4
    vmem2 = _clamp_vmem(2 * (blk2 + wbytes2) + scratch2 + live2 + (4 << 20), cap)
    cost2 = pl.CostEstimate(
        flops=int(B * (4 * S * S * D + 2 * S * D * D + 4 * S * D * F)),
        transcendentals=int(B * n_head * S * S),
        bytes_accessed=int(2 * x.size * x.dtype.itemsize
                           + B * S * D * isz + B * n_q * S * 2 * D * isz
                           + mask.size * mask.dtype.itemsize + wbytes2))

    return pl.pallas_call(
        functools.partial(attn_ffn_kernel, n_head, D),
        out_shape=jax.ShapeDtypeStruct((B, S, D), x.dtype),
        grid_spec=pltpu.PrefetchScalarGridSpec(
            num_scalar_prefetch=0,
            grid=(B, n_q, n_kv),
            in_specs=[pl.BlockSpec((1, TQ, D), lambda b, q, k: (b, q, 0)),        # x
                      pl.BlockSpec((1, 1, TKV), lambda b, q, k: (b, 0, k)),       # mask
                      pl.BlockSpec((1, TQ, D), lambda b, q, k: (b, q, 0)),        # q
                      pl.BlockSpec((1, TKV, 2 * D), lambda b, q, k: (b, k, 0))]   # kv
                     + [full_spec(w) for w in attn_weights],
            out_specs=pl.BlockSpec((1, TQ, D), lambda b, q, k: (b, q, 0)),
            scratch_shapes=[pltpu.VMEM((n_head, TQ, 1), jnp.float32),   # running max
                            pltpu.VMEM((n_head, TQ, 1), jnp.float32),   # running sum
                            pltpu.VMEM((TQ, D), jnp.float32)],          # P@V acc
        ),
        compiler_params=pltpu.CompilerParams(
            dimension_semantics=("parallel", "parallel", "arbitrary"),
            vmem_limit_bytes=vmem2),
        cost_estimate=cost2,
    )(x, mask, q_proj, kv_proj, *attn_weights)


# ---------------------------------------------------------------------------
# Pure-JAX f32 reference replicating the PyTorch forward (eval mode).
# ---------------------------------------------------------------------------
def reference(x, mask, p, n_head):
    def ln(v, g, b):
        mu = v.mean(-1, keepdims=True)
        var = ((v - mu) ** 2).mean(-1, keepdims=True)
        return (v - mu) / jnp.sqrt(var + 1e-5) * g + b

    B, S, D = x.shape
    dh = D // n_head
    h = ln(x, p["ln1_g"], p["ln1_b"])
    q = (h @ p["wq"] + p["bq"]).reshape(B, S, n_head, dh).transpose(0, 2, 1, 3)
    k = (h @ p["wk"] + p["bk"]).reshape(B, S, n_head, dh).transpose(0, 2, 1, 3)
    v = (h @ p["wv"] + p["bv"]).reshape(B, S, n_head, dh).transpose(0, 2, 1, 3)
    sc = jnp.einsum("bhqd,bhkd->bhqk", q, k) / math.sqrt(dh)
    sc = jnp.where(mask[:, None, :, :] == 0, -1e9, sc)
    pr = jax.nn.softmax(sc, axis=-1)
    o = jnp.einsum("bhqk,bhkd->bhqd", pr, v).transpose(0, 2, 1, 3).reshape(B, S, D)
    x1 = x + (o @ p["wo"] + p["bo"])
    h2 = ln(x1, p["ln2_g"], p["ln2_b"])
    ff = jax.nn.relu(h2 @ p["w1"] + p["b1"]) @ p["w2"] + p["b2"]
    return x1 + ff


if __name__ == "__main__":
    B, S, D, H, F = 2, 8, 32, 4, 64
    key = jax.random.PRNGKey(0)
    ks = jax.random.split(key, 16)

    def w(k, shape):
        return (0.1 * jax.random.normal(k, shape)).astype(jnp.float32)

    params = {
        "ln1_g": jnp.ones((1, D), jnp.float32),
        "ln1_b": jnp.zeros((1, D), jnp.float32),
        "wq": w(ks[0], (D, D)), "bq": w(ks[1], (1, D)),
        "wk": w(ks[2], (D, D)), "bk": w(ks[3], (1, D)),
        "wv": w(ks[4], (D, D)), "bv": w(ks[5], (1, D)),
        "wo": w(ks[6], (D, D)), "bo": w(ks[7], (1, D)),
        "ln2_g": jnp.ones((1, D), jnp.float32),
        "ln2_b": jnp.zeros((1, D), jnp.float32),
        "w1": w(ks[8], (D, F)), "b1": w(ks[9], (1, F)),
        "w2": w(ks[10], (F, D)), "b2": w(ks[11], (1, D)),
    }

    x = jax.random.normal(ks[12], (B, S, D), jnp.float32)
    # mask: 1 = attend, 0 = masked; batch 1 has the last two positions masked.
    mask = jnp.ones((B, 1, S), jnp.float32).at[1, 0, 6:].set(0.0)

    out = simple_encoder_layer(x, mask, params, H)
    out = jax.block_until_ready(out)

    ref = reference(x, mask, params, H)
    assert out.shape == (B, S, D)
    err = float(jnp.max(jnp.abs(out - ref)))
    # bf16 matmul inputs / bf16 q,kv intermediates vs f32 reference -> loose tol.
    assert jnp.allclose(out, ref, atol=2e-2, rtol=2e-2), f"max abs err {err}"
    print("KERNEL_OK")
</pallas_src>

<mosaic_0001>
module attributes {stable_mosaic.version = 11 : i64} {
  func.func @qkv_proj_kernel(%arg0: i32, %arg1: i32, %arg2: memref<1x8x32xf32, #tpu.memory_space<vmem>>, %arg3: memref<1x32xf32, #tpu.memory_space<vmem>>, %arg4: memref<1x32xf32, #tpu.memory_space<vmem>>, %arg5: memref<32x96xbf16, #tpu.memory_space<vmem>>, %arg6: memref<1x96xf32, #tpu.memory_space<vmem>>, %arg7: memref<1x8x32xbf16, #tpu.memory_space<vmem>>, %arg8: memref<1x8x64xbf16, #tpu.memory_space<vmem>>) attributes {dimension_semantics = [#tpu.dimension_semantics<parallel>, #tpu.dimension_semantics<parallel>], iteration_bounds = array<i64: 2, 1>, scalar_prefetch = 0 : i64, scratch_operands = 0 : i64, tpu.core_type = #tpu.core_type<tc>, window_params = [{transform_indices = @transform_0, window_bounds = array<i64: 1, 8, 32>}, {pipeline_mode = #tpu.pipeline_mode<synchronous>, transform_indices = @transform_1, window_bounds = array<i64: 1, 32>}, {pipeline_mode = #tpu.pipeline_mode<synchronous>, transform_indices = @transform_2, window_bounds = array<i64: 1, 32>}, {pipeline_mode = #tpu.pipeline_mode<synchronous>, transform_indices = @transform_3, window_bounds = array<i64: 32, 96>}, {pipeline_mode = #tpu.pipeline_mode<synchronous>, transform_indices = @transform_4, window_bounds = array<i64: 1, 96>}, {transform_indices = @transform_5, window_bounds = array<i64: 1, 8, 32>}, {transform_indices = @transform_6, window_bounds = array<i64: 1, 8, 64>}]} {
    %c0 = arith.constant 0 : index
    %c0_0 = arith.constant 0 : index
    %c0_1 = arith.constant 0 : index
    %0 = vector.load %arg2[%c0, %c0_0, %c0_1] : memref<1x8x32xf32, #tpu.memory_space<vmem>>, vector<1x8x32xf32>
    %1 = vector.shape_cast %0 : vector<1x8x32xf32> to vector<8x32xf32>
    %c0_2 = arith.constant 0 : index
    %c0_3 = arith.constant 0 : index
    %2 = vector.load %arg3[%c0_2, %c0_3] : memref<1x32xf32, #tpu.memory_space<vmem>>, vector<1x32xf32>
    %c0_4 = arith.constant 0 : index
    %c0_5 = arith.constant 0 : index
    %3 = vector.load %arg4[%c0_4, %c0_5] : memref<1x32xf32, #tpu.memory_space<vmem>>, vector<1x32xf32>
    %cst = arith.constant dense<0.000000e+00> : vector<8xf32>
    %4 = vector.multi_reduction <add>, %1, %cst [1] : vector<8x32xf32> to vector<8xf32>
    %5 = vector.shape_cast %4 : vector<8xf32> to vector<8x1xf32>
    %cst_6 = arith.constant 3.200000e+01 : f32
    %6 = vector.broadcast %cst_6 : f32 to vector<8x1xf32>
    %7 = arith.divf %5, %6 : vector<8x1xf32>
    %8 = vector.broadcast %7 : vector<8x1xf32> to vector<8x32xf32>
    %9 = arith.subf %1, %8 : vector<8x32xf32>
    %10 = arith.mulf %9, %9 : vector<8x32xf32>
    %cst_7 = arith.constant dense<0.000000e+00> : vector<8xf32>
    %11 = vector.multi_reduction <add>, %10, %cst_7 [1] : vector<8x32xf32> to vector<8xf32>
    %12 = vector.shape_cast %11 : vector<8xf32> to vector<8x1xf32>
    %cst_8 = arith.constant 3.200000e+01 : f32
    %13 = vector.broadcast %cst_8 : f32 to vector<8x1xf32>
    %14 = arith.divf %12, %13 : vector<8x1xf32>
    %15 = vector.broadcast %7 : vector<8x1xf32> to vector<8x32xf32>
    %16 = arith.subf %1, %15 : vector<8x32xf32>
    %cst_9 = arith.constant 9.99999974E-6 : f32
    %17 = vector.broadcast %cst_9 : f32 to vector<8x1xf32>
    %18 = arith.addf %14, %17 : vector<8x1xf32>
    %19 = math.rsqrt %18 : vector<8x1xf32>
    %20 = vector.broadcast %19 : vector<8x1xf32> to vector<8x32xf32>
    %21 = arith.mulf %16, %20 : vector<8x32xf32>
    %22 = vector.broadcast %2 : vector<1x32xf32> to vector<8x32xf32>
    %23 = arith.mulf %21, %22 : vector<8x32xf32>
    %24 = vector.broadcast %3 : vector<1x32xf32> to vector<8x32xf32>
    %25 = arith.addf %23, %24 : vector<8x32xf32>
    %26 = arith.truncf %25 : vector<8x32xf32> to vector<8x32xbf16>
    %c0_10 = arith.constant 0 : index
    %c0_11 = arith.constant 0 : index
    %27 = vector.load %arg5[%c0_10, %c0_11] : memref<32x96xbf16, #tpu.memory_space<vmem>>, vector<32x96xbf16>
    %cst_12 = arith.constant dense<0.000000e+00> : vector<8x96xf32>
    %28 = tpu.matmul %26, %27, %cst_12 {dimension_numbers = #tpu.dot_dimension_numbers<[1], [0], [0], [1], [0, 0, 1, 1], [], []>} : vector<8x32xbf16>, vector<32x96xbf16>, vector<8x96xf32> -> vector<8x96xf32>
    %c0_13 = arith.constant 0 : index
    %c0_14 = arith.constant 0 : index
    %29 = vector.load %arg6[%c0_13, %c0_14] : memref<1x96xf32, #tpu.memory_space<vmem>>, vector<1x96xf32>
    %30 = vector.broadcast %29 : vector<1x96xf32> to vector<8x96xf32>
    %31 = arith.addf %28, %30 : vector<8x96xf32>
    %32 = vector.extract_strided_slice %31 {offsets = [0, 0], sizes = [8, 32], strides = [1, 1]} : vector<8x96xf32> to vector<8x32xf32>
    %cst_15 = arith.constant 0.353553385 : f32
    %33 = vector.broadcast %cst_15 : f32 to vector<8x32xf32>
    %34 = arith.mulf %32, %33 : vector<8x32xf32>
    %35 = arith.truncf %34 : vector<8x32xf32> to vector<8x32xbf16>
    %c0_16 = arith.constant 0 : index
    %c0_17 = arith.constant 0 : index
    %c0_18 = arith.constant 0 : index
    %36 = vector.load %arg7[%c0_16, %c0_17, %c0_18] : memref<1x8x32xbf16, #tpu.memory_space<vmem>>, vector<1x8x32xbf16>
    %37 = vector.shape_cast %36 : vector<1x8x32xbf16> to vector<8x32xbf16>
    %38 = vector.shape_cast %35 : vector<8x32xbf16> to vector<1x8x32xbf16>
    tpu.vector_store %arg7[%c0_16, %c0_17, %c0_18], %38 {strides = array<i32>} : memref<1x8x32xbf16, #tpu.memory_space<vmem>>, vector<1x8x32xbf16>,
    %39 = vector.extract_strided_slice %31 {offsets = [0, 32], sizes = [8, 64], strides = [1, 1]} : vector<8x96xf32> to vector<8x64xf32>
    %40 = arith.truncf %39 : vector<8x64xf32> to vector<8x64xbf16>
    %c0_19 = arith.constant 0 : index
    %c0_20 = arith.constant 0 : index
    %c0_21 = arith.constant 0 : index
    %41 = vector.load %arg8[%c0_19, %c0_20, %c0_21] : memref<1x8x64xbf16, #tpu.memory_space<vmem>>, vector<1x8x64xbf16>
    %42 = vector.shape_cast %41 : vector<1x8x64xbf16> to vector<8x64xbf16>
    %43 = vector.shape_cast %40 : vector<8x64xbf16> to vector<1x8x64xbf16>
    tpu.vector_store %arg8[%c0_19, %c0_20, %c0_21], %43 {strides = array<i32>} : memref<1x8x64xbf16, #tpu.memory_space<vmem>>, vector<1x8x64xbf16>,
    return
  }
  func.func @transform_0(%arg0: i32, %arg1: i32) -> (i32, i32, i32) {
    %c0_i32 = arith.constant 0 : i32
    %c0_i32_0 = arith.constant 0 : i32
    return %arg0, %arg1, %c0_i32 : i32, i32, i32
  }
  func.func @transform_1(%arg0: i32, %arg1: i32) -> (i32, i32) {
    %c0_i32 = arith.constant 0 : i32
    %c0_i32_0 = arith.constant 0 : i32
    %c0_i32_1 = arith.constant 0 : i32
    return %c0_i32, %c0_i32_0 : i32, i32
  }
  func.func @transform_2(%arg0: i32, %arg1: i32) -> (i32, i32) {
    %c0_i32 = arith.constant 0 : i32
    %c0_i32_0 = arith.constant 0 : i32
    %c0_i32_1 = arith.constant 0 : i32
    return %c0_i32, %c0_i32_0 : i32, i32
  }
  func.func @transform_3(%arg0: i32, %arg1: i32) -> (i32, i32) {
    %c0_i32 = arith.constant 0 : i32
    %c0_i32_0 = arith.constant 0 : i32
    %c0_i32_1 = arith.constant 0 : i32
    return %c0_i32, %c0_i32_0 : i32, i32
  }
  func.func @transform_4(%arg0: i32, %arg1: i32) -> (i32, i32) {
    %c0_i32 = arith.constant 0 : i32
    %c0_i32_0 = arith.constant 0 : i32
    %c0_i32_1 = arith.constant 0 : i32
    return %c0_i32, %c0_i32_0 : i32, i32
  }
  func.func @transform_5(%arg0: i32, %arg1: i32) -> (i32, i32, i32) {
    %c0_i32 = arith.constant 0 : i32
    %c0_i32_0 = arith.constant 0 : i32
    return %arg0, %arg1, %c0_i32 : i32, i32, i32
  }
  func.func @transform_6(%arg0: i32, %arg1: i32) -> (i32, i32, i32) {
    %c0_i32 = arith.constant 0 : i32
    %c0_i32_0 = arith.constant 0 : i32
    return %arg0, %arg1, %c0_i32 : i32, i32, i32
  }
}

</mosaic_0001>

<llo_original>
// kernel: tpu_custom_call.1
$region0: #{tpu_custom_call.1}
  #allocation0 [shape = 'u32[]', space=smem, size = 0x4, offset = 0x4, fixed_abs, tag = 'smem constant byte address 0x4 - core index']
  #allocation1 [shape = 'u32[144,128]{1,0:T(1,128)}', space=vmem, size = 0x12000, scoped, tag = 'internal scratch']
  %s0 = inlined_call_operand.hbm [shape: f32[2,8,32], index: 0, kind: input, shape index: {}]
  %s1 = inlined_call_operand.vmem [shape: f32[1,32], index: 1, kind: input, shape index: {}]
  %s2 = inlined_call_operand.vmem [shape: f32[1,32], index: 2, kind: input, shape index: {}]
  %s3 = inlined_call_operand.hbm [shape: bf16[32,96], index: 3, kind: input, shape index: {}]
  %s4 = inlined_call_operand.vmem [shape: f32[1,96], index: 4, kind: input, shape index: {}]
  %s5 = inlined_call_operand.hbm [shape: bf16[2,8,32], index: 5, kind: output, shape index: {0}]
  %s6 = inlined_call_operand.hbm [shape: bf16[2,8,64], index: 6, kind: output, shape index: {1}]
  %7 = xla_tuple %s5, %s6
  %s8 = sld [smem:[#allocation0]]
  $region69: #{tpu_custom_call.1} parent=0
    _
  %s10 = ssub.s32 1, %s8
  %s11 = scalar_select 0, %s10, %s8
  $region1: #{tpu_custom_call.1} parent=0
    #allocation2 [shape = 'u8[8192]{0}', space=vmem, size = 0x2000, scoped, tag = 'input window, operand 0']
    #allocation3 [shape = 's32[2]{0}', space=sflag, size = 0x8, scoped, tag = 'scoped memory for tpu_custom_call.1']
    #allocation4 [shape = 's32[2]{0}', space=sflag, size = 0x8, scoped, tag = 'scoped memory for tpu_custom_call.1']
    #allocation5 [shape = 'u8[8192]{0}', space=vmem, size = 0x2000, scoped, tag = 'input window, operand 3, single buffered']
    #allocation6 [shape = 's32[1]{0}', space=sflag, size = 0x4, scoped, tag = 'scoped memory for tpu_custom_call.1']
    #allocation7 [shape = 'u8[4096]{0}', space=vmem, size = 0x1000, scoped, tag = 'output window, operand 0']
    #allocation8 [shape = 'u8[4096]{0}', space=vmem, size = 0x1000, scoped, tag = 'output window, operand 1']
    #allocation9 [shape = 's32[2]{0}', space=sflag, size = 0x8, scoped, tag = 'scoped memory for tpu_custom_call.1']
    %12 = vsyncpa [#allocation3], 0
    %s13 = scalar_lea.sflag [#allocation3], 1
    %14 = vsyncpa %s13, 0
    %15 = vsyncpa [#allocation6], 0
    %16 = vsyncpa [#allocation4], 0
    %s17 = scalar_lea.sflag [#allocation4], 1
    %18 = vsyncpa %s17, 0
    %19 = vsyncpa [#allocation9], 0
    %s20 = scalar_lea.sflag [#allocation9], 1
    %21 = vsyncpa %s20, 0
    loop: start=0, step=1, limit=4
    $region2: #{tpu_custom_call.1} parent=1 // loop_pre_header
      _
    $region3: #{tpu_custom_call.1} parent=1 // loop_header
      %s23 = sphi 0, %s27
      %p24 = scmp.ge.s32.totalorder %s23, 4
      %s30 = sphi 0, %s42
      %s31 = sphi 0, %s38
      %s32 = sphi 0, %s30
      %s33 = sphi 0, %s31
      %s34 = sphi 0, %s32
      %s35 = sphi 0, %s33
      %s47 = sphi 0, %s49
      %s50 = sphi 0, %s47
      %s51 = sphi 0, %s50
      %s67 = sphi 0, %s51
      %s71 = sphi 0, %s71
      %s73 = sphi 0, %s71
      %s74 = sphi 0, %s73
      %s88 = sphi 0, %s74
      %s92 = sphi 0, %s92
      %s94 = sphi 0, %s92
      %s95 = sphi 0, %s94
      %s109 = sphi 0, %s95
      %s113 = sphi 0, %s113
      %s115 = sphi 0, %s113
      %s116 = sphi 0, %s115
      %s130 = sphi 0, %s116
      %s134 = sphi 0, %s134
      %s136 = sphi 0, %s134
      %s137 = sphi 0, %s136
      %s151 = sphi 0, %s137
      %s159 = sphi 0, %s161
      %s162 = sphi 0, %s159
      %s163 = sphi 0, %s162
      %s179 = sphi 0, %s163
      %s187 = sphi 0, %s189
      %s190 = sphi 0, %s187
      %s191 = sphi 0, %s190
      %s207 = sphi 0, %s191
    $region4: #{tpu_custom_call.1} parent=1 // loop_header_branch
      %26 = sbr.rel (%p24) target = $region8
    $region5: #{tpu_custom_call.1} parent=1 // loop_body
      %s28 = ssub.s32 %s23, 1
      %s29 = ssub.s32 %s23, 2
      %s36 = sadd.s32 1, %s31
      %p37 = scmp.ge.s32.totalorder %s36, 1
      %s38 = scalar_select %p37, 0, %s36
      %s39 = sadd.s32 1, %s30
      %s40 = scalar_select %p37, %s39, %s30
      %p41 = scmp.ge.s32.totalorder %s40, 2
      %s42 = scalar_select %p41, 0, %s40
      %s43 = ssub.s32 %s30, %s42
      %s44 = ssub.s32 %s31, %s38
      %s45 = sor.u32 %s43, %s44
      %p46 = scmp.eq.s32.totalorder %s45, 0
      %s48 = sadd.s32 %s47, 1
      %s49 = scalar_select %p46, %s47, %s48
      %p52 = pneg %p46
      %p53 = scmp.eq.s32.totalorder %s23, 1
      %p54 = por %p52, %p53
      %p55 = scmp.ne.s32.totalorder %s47, %s50
      %p56 = scmp.eq.s32.totalorder %s23, 0
      %p57 = por %p55, %p56
      %p58 = scmp.ne.s32.totalorder %s47, %s50
      %p59 = scmp.eq.s32.totalorder %s28, 1
      %p60 = por %p58, %p59
      %p61 = scmp.ne.s32.totalorder %s50, %s51
      %p62 = scmp.eq.s32.totalorder %s28, 0
      %p63 = por %p61, %p62
      %p64 = scmp.ne.s32.totalorder %s50, %s51
      %p65 = scmp.eq.s32.totalorder %s29, 1
      %p66 = por %p64, %p65
      %p68 = scmp.ne.s32.totalorder %s51, %s67
      %p69 = scmp.eq.s32.totalorder %s29, 0
      %p70 = por %p68, %p69
      %s72 = sadd.s32 %s71, 1
      %p75 = scmp.eq.s32.totalorder %s23, 1
      %p76 = scmp.ne.s32.totalorder %s71, %s73
      %p77 = scmp.eq.s32.totalorder %s23, 0
      %p78 = por %p76, %p77
      %p79 = scmp.ne.s32.totalorder %s71, %s73
      %p80 = scmp.eq.s32.totalorder %s28, 1
      %p81 = por %p79, %p80
      %p82 = scmp.ne.s32.totalorder %s73, %s74
      %p83 = scmp.eq.s32.totalorder %s28, 0
      %p84 = por %p82, %p83
      %p85 = scmp.ne.s32.totalorder %s73, %s74
      %p86 = scmp.eq.s32.totalorder %s29, 1
      %p87 = por %p85, %p86
      %p89 = scmp.ne.s32.totalorder %s74, %s88
      %p90 = scmp.eq.s32.totalorder %s29, 0
      %p91 = por %p89, %p90
      %s93 = sadd.s32 %s92, 1
      %p96 = scmp.eq.s32.totalorder %s23, 1
      %p97 = scmp.ne.s32.totalorder %s92, %s94
      %p98 = scmp.eq.s32.totalorder %s23, 0
      %p99 = por %p97, %p98
      %p100 = scmp.ne.s32.totalorder %s92, %s94
      %p101 = scmp.eq.s32.totalorder %s28, 1
      %p102 = por %p100, %p101
      %p103 = scmp.ne.s32.totalorder %s94, %s95
      %p104 = scmp.eq.s32.totalorder %s28, 0
      %p105 = por %p103, %p104
      %p106 = scmp.ne.s32.totalorder %s94, %s95
      %p107 = scmp.eq.s32.totalorder %s29, 1
      %p108 = por %p106, %p107
      %p110 = scmp.ne.s32.totalorder %s95, %s109
      %p111 = scmp.eq.s32.totalorder %s29, 0
      %p112 = por %p110, %p111
      %s114 = sadd.s32 %s113, 1
      %p117 = scmp.eq.s32.totalorder %s23, 1
      %p118 = scmp.ne.s32.totalorder %s113, %s115
      %p119 = scmp.eq.s32.totalorder %s23, 0
      %p120 = por %p118, %p119
      %p121 = scmp.ne.s32.totalorder %s113, %s115
      %p122 = scmp.eq.s32.totalorder %s28, 1
      %p123 = por %p121, %p122
      %p124 = scmp.ne.s32.totalorder %s115, %s116
      %p125 = scmp.eq.s32.totalorder %s28, 0
      %p126 = por %p124, %p125
      %p127 = scmp.ne.s32.totalorder %s115, %s116
      %p128 = scmp.eq.s32.totalorder %s29, 1
      %p129 = por %p127, %p128
      %p131 = scmp.ne.s32.totalorder %s116, %s130
      %p132 = scmp.eq.s32.totalorder %s29, 0
      %p133 = por %p131, %p132
      %s135 = sadd.s32 %s134, 1
      %p138 = scmp.eq.s32.totalorder %s23, 1
      %p139 = scmp.ne.s32.totalorder %s134, %s136
      %p140 = scmp.eq.s32.totalorder %s23, 0
      %p141 = por %p139, %p140
      %p142 = scmp.ne.s32.totalorder %s134, %s136
      %p143 = scmp.eq.s32.totalorder %s28, 1
      %p144 = por %p142, %p143
      %p145 = scmp.ne.s32.totalorder %s136, %s137
      %p146 = scmp.eq.s32.totalorder %s28, 0
      %p147 = por %p145, %p146
      %p148 = scmp.ne.s32.totalorder %s136, %s137
      %p149 = scmp.eq.s32.totalorder %s29, 1
      %p150 = por %p148, %p149
      %p152 = scmp.ne.s32.totalorder %s137, %s151
      %p153 = scmp.eq.s32.totalorder %s29, 0
      %p154 = por %p152, %p153
      %s155 = ssub.s32 %s30, %s42
      %s156 = ssub.s32 %s31, %s38
      %s157 = sor.u32 %s155, %s156
      %p158 = scmp.eq.s32.totalorder %s157, 0
      %s160 = sadd.s32 %s159, 1
      %s161 = scalar_select %p158, %s159, %s160
      %p164 = pneg %p158
      %p165 = scmp.eq.s32.totalorder %s23, 1
      %p166 = por %p164, %p165
      %p167 = scmp.ne.s32.totalorder %s159, %s162
      %p168 = scmp.eq.s32.totalorder %s23, 0
      %p169 = por %p167, %p168
      %p170 = scmp.ne.s32.totalorder %s159, %s162
      %p171 = scmp.eq.s32.totalorder %s28, 1
      %p172 = por %p170, %p171
      %p173 = scmp.ne.s32.totalorder %s162, %s163
      %p174 = scmp.eq.s32.totalorder %s28, 0
      %p175 = por %p173, %p174
      %p176 = scmp.ne.s32.totalorder %s162, %s163
      %p177 = scmp.eq.s32.totalorder %s29, 1
      %p178 = por %p176, %p177
      %p180 = scmp.ne.s32.totalorder %s163, %s179
      %p181 = scmp.eq.s32.totalorder %s29, 0
      %p182 = por %p180, %p181
      %s183 = ssub.s32 %s30, %s42
      %s184 = ssub.s32 %s31, %s38
      %s185 = sor.u32 %s183, %s184
      %p186 = scmp.eq.s32.totalorder %s185, 0
      %s188 = sadd.s32 %s187, 1
      %s189 = scalar_select %p186, %s187, %s188
      %p192 = pneg %p186
      %p193 = scmp.eq.s32.totalorder %s23, 1
      %p194 = por %p192, %p193
      %p195 = scmp.ne.s32.totalorder %s187, %s190
      %p196 = scmp.eq.s32.totalorder %s23, 0
      %p197 = por %p195, %p196
      %p198 = scmp.ne.s32.totalorder %s187, %s190
      %p199 = scmp.eq.s32.totalorder %s28, 1
      %p200 = por %p198, %p199
      %p201 = scmp.ne.s32.totalorder %s190, %s191
      %p202 = scmp.eq.s32.totalorder %s28, 0
      %p203 = por %p201, %p202
      %p204 = scmp.ne.s32.totalorder %s190, %s191
      %p205 = scmp.eq.s32.totalorder %s29, 1
      %p206 = por %p204, %p205
      %p208 = scmp.ne.s32.totalorder %s191, %s207
      %p209 = scmp.eq.s32.totalorder %s29, 0
      %p210 = por %p208, %p209
      %p211 = scmp.le.s32.totalorder 1, %s23
      %p212 = scmp.lt.s32.totalorder %s23, 3
      %p213 = pnand %p211, %p212
      %p214 = pneg %p213
      // Predicated region
      $region9: #{tpu_custom_call.1} parent=5 // pred_check
        _
      $region10: #{tpu_custom_call.1} parent=5 // pred_check_branch
        %216 = sbr.rel (%p213) target = $region12
      $region11: #{tpu_custom_call.1} parent=5 // pred_region
        %s217 = ssub.s32 %s23, 1
        // Predicated region
        $region13: #{tpu_custom_call.1} parent=11 // pred_check
          %p218 = pneg %p84
        $region14: #{tpu_custom_call.1} parent=11 // pred_check_branch
          %220 = sbr.rel (%p218) target = $region16
        $region15: #{tpu_custom_call.1} parent=11 // pred_region
          _
        $region16: #{tpu_custom_call.1} parent=11 // pred_fallthru
          _
        // Predicated region
        $region17: #{tpu_custom_call.1} parent=11 // pred_check
          %p221 = pneg %p105
        $region18: #{tpu_custom_call.1} parent=11 // pred_check_branch
          %223 = sbr.rel (%p221) target = $region20
        $region19: #{tpu_custom_call.1} parent=11 // pred_region
          _
        $region20: #{tpu_custom_call.1} parent=11 // pred_fallthru
          _
        // Predicated region
        $region21: #{tpu_custom_call.1} parent=11 // pred_check
          %p224 = pneg %p126
        $region22: #{tpu_custom_call.1} parent=11 // pred_check_branch
          %226 = sbr.rel (%p224) target = $region24
        $region23: #{tpu_custom_call.1} parent=11 // pred_region
          %s228 = ssub.s32 256, 256
          %229 = vsyncadd [#allocation6], %s228
          %s230 = sshll.u32 [#allocation5], 4
          %s231 = int_to_ptr.vmem [resolvable:$true] %s230
          %236 = dma.hbm_to_vmem [thread:$0]  %s3, 256, %s231, [#allocation6], 64, 64, 4
        $region24: #{tpu_custom_call.1} parent=11 // pred_fallthru
          _
        // Predicated region
        $region25: #{tpu_custom_call.1} parent=11 // pred_check
          %p237 = pneg %p147
        $region26: #{tpu_custom_call.1} parent=11 // pred_check_branch
          %239 = sbr.rel (%p237) target = $region28
        $region27: #{tpu_custom_call.1} parent=11 // pred_region
          _
        $region28: #{tpu_custom_call.1} parent=11 // pred_fallthru
          _
      $region12: #{tpu_custom_call.1} parent=5 // pred_fallthru
        _
      %p240 = scmp.lt.s32.totalorder %s23, 2
      // Predicated region
      $region29: #{tpu_custom_call.1} parent=5 // pred_check
        %p241 = pneg %p240
      $region30: #{tpu_custom_call.1} parent=5 // pred_check_branch
        %243 = sbr.rel (%p241) target = $region32
      $region31: #{tpu_custom_call.1} parent=5 // pred_region
        // Predicated region
        $region33: #{tpu_custom_call.1} parent=31 // pred_check
          %p244 = pneg %p57
        $region34: #{tpu_custom_call.1} parent=31 // pred_check_branch
          %246 = sbr.rel (%p244) target = $region36
        $region35: #{tpu_custom_call.1} parent=31 // pred_region
          %s247 = sand.u32 %s47, 1
          %s248 = scalar_lea.sflag [#allocation3], %s247
          %s249 = sand.u32 %s47, 1
          %s250 = smul.addr %s249, 8
          %s251 = scalar_lea.vmem [#allocation2], %s250
          %s253 = ssub.s32 128, 128
          %254 = vsyncadd %s248, %s253
          %s255 = sadd.s32 %s31, %s30
          %s256 = smul.addr %s255, 128
          %s257 = scalar_lea.hbm %s0, %s256
          %s259 = sshll.u32 %s251, 4
          %s260 = int_to_ptr.vmem [resolvable:$true] %s259
          %262 = dma.hbm_to_vmem [thread:$0]  %s257, 128, %s260, %s248
        $region36: #{tpu_custom_call.1} parent=31 // pred_fallthru
          _
      $region32: #{tpu_custom_call.1} parent=5 // pred_fallthru
        _
      %p263 = scmp.le.s32.totalorder 1, %s23
      %p264 = scmp.lt.s32.totalorder %s23, 3
      %p265 = pnand %p263, %p264
      %p266 = pneg %p265
      // Predicated region
      $region37: #{tpu_custom_call.1} parent=5 // pred_check
        _
      $region38: #{tpu_custom_call.1} parent=5 // pred_check_branch
        %268 = sbr.rel (%p265) target = $region40
      $region39: #{tpu_custom_call.1} parent=5 // pred_region
        %s269 = ssub.s32 %s23, 1
        %s270 = sand.u32 %s50, 1
        %s271 = scalar_lea.sflag [#allocation3], %s270
        %s272 = sand.u32 %s50, 1
        %s273 = smul.addr %s272, 8
        %s274 = scalar_lea.vmem [#allocation2], %s273
        // Predicated region
        $region41: #{tpu_custom_call.1} parent=39 // pred_check
          %p275 = pneg %p63
        $region42: #{tpu_custom_call.1} parent=39 // pred_check_branch
          %277 = sbr.rel (%p275) target = $region44
        $region43: #{tpu_custom_call.1} parent=39 // pred_region
          %278 = dma.done %s271, 128
        $region44: #{tpu_custom_call.1} parent=39 // pred_fallthru
          _
        // Predicated region
        $region45: #{tpu_custom_call.1} parent=39 // pred_check
          %p279 = pneg %p126
        $region46: #{tpu_custom_call.1} parent=39 // pred_check_branch
          %281 = sbr.rel (%p279) target = $region48
        $region47: #{tpu_custom_call.1} parent=39 // pred_region
          %282 = dma.done [#allocation6], 256
        $region48: #{tpu_custom_call.1} parent=39 // pred_fallthru
          _
        %s283 = sand.u32 %s50, 1
        %s284 = scalar_lea.sflag [#allocation3], %s283
        %s285 = sand.u32 %s50, 1
        %s286 = smul.addr %s285, 8
        %s287 = scalar_lea.vmem [#allocation2], %s286
        %p288 = pneg %p63
        %p289 = pneg %p60
        %p290 = pneg %p84
        %p291 = pneg %p81
        %p292 = pneg %p105
        %p293 = pneg %p102
        %p294 = pneg %p126
        %p295 = pneg %p123
        %p296 = pneg %p147
        %p297 = pneg %p144
        %p298 = pneg %p175
        %p299 = pneg %p172
        %s300 = sand.u32 %s162, 1
        %s301 = scalar_lea.sflag [#allocation4], %s300
        %s302 = sand.u32 %s162, 1
        %s303 = smul.addr %s302, 4
        %s304 = scalar_lea.vmem [#allocation7], %s303
        %p305 = pneg %p203
        %p306 = pneg %p200
        %s307 = sand.u32 %s190, 1
        %s308 = scalar_lea.sflag [#allocation9], %s307
        %s309 = sand.u32 %s190, 1
        %s310 = smul.addr %s309, 4
        %s311 = scalar_lea.vmem [#allocation8], %s310
        %v313 = vld [vmem:[%s274] sm:$0xff]
        %v314 = vld [vmem:[%s1] sm:$0x1]
        %v315 = vld [vmem:[%s2] sm:$0x1]
        %vm316 = vcmask 261120
        %v317 = vsel %vm316, %v313, 0.0
        %318 = vadd.xlane.f32.xlu0 %v317
        %v319 = vpop.xlane.xlu0 %318
        %v320 = vrcp.pop 32.0
        %v321 = vmul.f32 %v319, %v320
        %v322 = vsub.f32 %v313, %v321
        %v323 = vmul.f32 %v322, %v322
        %v324 = vsel %vm316, %v323, 0.0
        %325 = vadd.xlane.f32.xlu0 %v324
        %v326 = vpop.xlane.xlu0 %325
        %v327 = vmul.f32 %v326, %v320
        %v328 = vadd.f32 %v327, 1e-05
        %v329 = vrsqrt.pop %v328
        %v330 = vmul.f32 %v322, %v329
        %v332 = vlaneseq
        %v333 = vshrl.u32 %v332, 7
        %v334 = vsub.s32 0, %v333
        %v335 = vrot.slane %v314, %v334
        %v337 = vmul.f32 %v330, %v335
        %v339 = vlaneseq
        %v340 = vshrl.u32 %v339, 7
        %v341 = vsub.s32 0, %v340
        %v342 = vrot.slane %v315, %v341
        %v344 = vadd.f32 %v337, %v342
        %v345 = vpack.c.bf16 %v344, %v344
        %v346 = vld [vmem:[#allocation5] sm:$0xf]
        %v347 = vld [vmem:[#allocation5 + $0x4] sm:$0xf]
        %v348 = vld [vmem:[#allocation5 + $0x8] sm:$0xf]
        %v349 = vld [vmem:[#allocation5 + $0xc] sm:$0xf]
        %v350 = vld [vmem:[%s4] sm:$0x1]
        %v352 = vlaneseq
        %v353 = vshrl.u32 %v352, 7
        %v354 = vsub.s32 0, %v353
        %v355 = vrot.slane %v350, %v354
        %v361 = vunpack.c.l.b16 %v346
        %v362 = vunpack.c.l.b16 %v347
        %v363 = vunpack.c.l.b16 %v348
        %v364 = vunpack.c.l.b16 %v349
        %v365 = vpack.c.b16 %v362, %v361
        %v366 = vpack.c.b16 %v364, %v363
        %v370 = vsel %vm316, %v345, 0
        %372 = vmatprep.subr.bf16.mxu0 0
        %373 = vmatpush1.bf16.msra.mxu0 %v365
        %374 = vmatprep.subr.bf16.mxu0 0
        %375 = vmatpush1.bf16.msra.mxu0 %v366
        %376 = vmatprep.subr.bf16.mxu0 0
        %377 = vmatpush1.bf16.msra.mxu0 0
        %378 = vmatprep.subr.bf16.mxu0 0
        %379 = vmatpush1.bf16.msra.mxu0 0
        %380 = vmatprep.subr.bf16.mxu0 0
        %381 = vmatpush1.bf16.msra.mxu0 0
        %382 = vmatprep.subr.bf16.mxu0 0
        %383 = vmatpush1.bf16.msra.mxu0 0
        %384 = vmatprep.subr.bf16.mxu0 0
        %385 = vmatpush1.bf16.msra.mxu0 0
        %386 = vmatprep.subr.bf16.mxu0 0
        %387 = vmatpush1.bf16.msra.mxu0 0
        %388 = vmatprep.subr.bf16.mxu0 0
        %389 = vmatpush1.bf16.msra.mxu0 0
        %390 = vmatprep.subr.bf16.mxu0 0
        %391 = vmatpush1.bf16.msra.mxu0 0
        %392 = vmatprep.subr.bf16.mxu0 0
        %393 = vmatpush1.bf16.msra.mxu0 0
        %394 = vmatprep.subr.bf16.mxu0 0
        %395 = vmatpush1.bf16.msra.mxu0 0
        %396 = vmatprep.subr.bf16.mxu0 0
        %397 = vmatpush1.bf16.msra.mxu0 0
        %398 = vmatprep.subr.bf16.mxu0 0
        %399 = vmatpush1.bf16.msra.mxu0 0
        %400 = vmatprep.subr.bf16.mxu0 0
        %401 = vmatpush1.bf16.msra.mxu0 0
        %402 = vmatprep.subr.bf16.mxu0 0
        %403 = vmatpush1.bf16.msra.mxu0 0
        %404 = vmatprep.mubr.bf16.mxu0 0
        %405 = vmatmul.mubr.bf16.gmra.mrb[0].mxu0 %v370
        %v406 = vpop.f32.mrb[0].mxu0
        %v407 = vadd.f32 %v355, %v406
        %v408 = vpop.f32.mrb[0].mxu0
        %v409 = vpop.f32.mrb[0].mxu0
        %v410 = vpop.f32.mrb[0].mxu0
        %411 = vdwg.mxu0
        %v412 = vmul.f32 %v407, 0.35355338
        %v413 = vpack.c.bf16 %v412, %v412
        %vm414 = vcmask 257024
        %415 = vst.msk [vmem:[%s304] sm:$0xf] %vm414, %v413
        %v416 = vpack.c.bf16 %v407, %v407
        %v418 = vunpack.c.l.b16 %v416
        %v419 = vpack.c.b16 %v418, %v418
        %420 = vrot.lane.b32.xlu0 %v419, 96
        %v421 = vpop.permute.xlu0 %420
        %vm423 = vcmask 519168
        %424 = vst.msk [vmem:[%s311] sm:$0xf] %vm423, %v421
        %s425 = sand.u32 %s162, 1
        %s426 = scalar_lea.sflag [#allocation4], %s425
        %s427 = sand.u32 %s162, 1
        %s428 = smul.addr %s427, 4
        %s429 = scalar_lea.vmem [#allocation7], %s428
        %s430 = sand.u32 %s190, 1
        %s431 = scalar_lea.sflag [#allocation9], %s430
        %s432 = sand.u32 %s190, 1
        %s433 = smul.addr %s432, 4
        %s434 = scalar_lea.vmem [#allocation8], %s433
        // Predicated region
        $region49: #{tpu_custom_call.1} parent=39 // pred_check
          %p435 = pneg %p172
        $region50: #{tpu_custom_call.1} parent=39 // pred_check_branch
          %437 = sbr.rel (%p435) target = $region52
        $region51: #{tpu_custom_call.1} parent=39 // pred_region
          %s439 = ssub.s32 64, 64
          %440 = vsyncadd %s426, %s439
          %s441 = sadd.s32 %s33, %s32
          %s442 = smul.addr %s441, 64
          %s443 = scalar_lea.hbm %s5, %s442
          %s445 = sshll.u32 %s429, 4
          %s446 = int_to_ptr.vmem [resolvable:$true] %s445
          %448 = dma.vmem_to_hbm [thread:$0]  %s446, 64, %s443, %s426
        $region52: #{tpu_custom_call.1} parent=39 // pred_fallthru
          _
        // Predicated region
        $region53: #{tpu_custom_call.1} parent=39 // pred_check
          %p449 = pneg %p200
        $region54: #{tpu_custom_call.1} parent=39 // pred_check_branch
          %451 = sbr.rel (%p449) target = $region56
        $region55: #{tpu_custom_call.1} parent=39 // pred_region
          %s453 = ssub.s32 64, 64
          %454 = vsyncadd %s431, %s453
          %s455 = sadd.s32 %s33, %s32
          %s456 = smul.addr %s455, 64
          %s457 = scalar_lea.hbm %s6, %s456
          %s459 = sshll.u32 %s434, 4
          %s460 = int_to_ptr.vmem [resolvable:$true] %s459
          %462 = dma.vmem_to_hbm [thread:$0]  %s460, 64, %s457, %s431
        $region56: #{tpu_custom_call.1} parent=39 // pred_fallthru
          _
      $region40: #{tpu_custom_call.1} parent=5 // pred_fallthru
        _
      %p463 = scmp.le.s32.totalorder 2, %s23
      // Predicated region
      $region57: #{tpu_custom_call.1} parent=5 // pred_check
        %p464 = pneg %p463
      $region58: #{tpu_custom_call.1} parent=5 // pred_check_branch
        %466 = sbr.rel (%p464) target = $region60
      $region59: #{tpu_custom_call.1} parent=5 // pred_region
        %s467 = ssub.s32 %s23, 2
        // Predicated region
        $region61: #{tpu_custom_call.1} parent=59 // pred_check
          %p468 = pneg %p178
        $region62: #{tpu_custom_call.1} parent=59 // pred_check_branch
          %470 = sbr.rel (%p468) target = $region64
        $region63: #{tpu_custom_call.1} parent=59 // pred_region
          %s471 = sand.u32 %s163, 1
          %s472 = scalar_lea.sflag [#allocation4], %s471
          %s473 = sand.u32 %s163, 1
          %s474 = smul.addr %s473, 4
          %s475 = scalar_lea.vmem [#allocation7], %s474
          %476 = dma.done %s472, 64
        $region64: #{tpu_custom_call.1} parent=59 // pred_fallthru
          _
        // Predicated region
        $region65: #{tpu_custom_call.1} parent=59 // pred_check
          %p477 = pneg %p206
        $region66: #{tpu_custom_call.1} parent=59 // pred_check_branch
          %479 = sbr.rel (%p477) target = $region68
        $region67: #{tpu_custom_call.1} parent=59 // pred_region
          %s480 = sand.u32 %s191, 1
          %s481 = scalar_lea.sflag [#allocation9], %s480
          %s482 = sand.u32 %s191, 1
          %s483 = smul.addr %s482, 4
          %s484 = scalar_lea.vmem [#allocation8], %s483
          %485 = dma.done %s481, 64
        $region68: #{tpu_custom_call.1} parent=59 // pred_fallthru
          _
      $region60: #{tpu_custom_call.1} parent=5 // pred_fallthru
        _
    $region6: #{tpu_custom_call.1} parent=1 // loop_footer
      %s27 = sadd.s32 1, %s23
    $region7: #{tpu_custom_call.1} parent=1 // loop_footer_branch
      %22 = sbr.rel target = $region3
    $region8: #{tpu_custom_call.1} parent=1 // loop_exit
      _
    %486 = vsyncpa [#allocation3], 1
    %s487 = scalar_lea.sflag [#allocation3], 1
    %488 = vsyncpa %s487, 1
    %489 = vsyncpa [#allocation6], 1
    %490 = vsyncpa [#allocation4], 1
    %s491 = scalar_lea.sflag [#allocation4], 1
    %492 = vsyncpa %s491, 1
    %493 = vsyncpa [#allocation9], 1
    %s494 = scalar_lea.sflag [#allocation9], 1
    %495 = vsyncpa %s494, 1

</llo_original>
